<compile_context>
chip_gen: v6e
topology: v6e:2x2x1
jax: 0.10.0
libtpu: 0.0.40
codegen_flags: <defaults>
</compile_context>

<pallas_src>
import functools

import jax
import jax.numpy as jnp
from jax.experimental import pallas as pl
from jax.experimental.pallas import tpu as pltpu

_LANES = 128
_SUBLANES = 8


def _focal_loss_kernel(alpha_ref, x_ref, t_ref, out_ref, *, gamma, num_classes,
                       tile_rows):
    # alpha_ref: (C,) f32 in SMEM
    # x_ref:     (C, tile_rows, 128) logits (native dtype) in VMEM
    # t_ref:     (tile_rows, 128) int32 labels (-1 marks padding) in VMEM
    # out_ref:   (1, 8, 128) f32 per-split accumulator, resident across the
    #            inner (reduction) grid axis.
    @pl.when(pl.program_id(1) == 0)
    def _():
        out_ref[...] = jnp.zeros_like(out_ref)

    t = t_ref[...]                                            # (TR, 128) i32

    # Per-class logits as full-lane (TR, 128) f32 tiles; C is a tiny static
    # unrolled loop so the softmax reduction over classes is elementwise VPU.
    xs = [x_ref[c].astype(jnp.float32) for c in range(num_classes)]

    m = xs[0]
    for c in range(1, num_classes):
        m = jnp.maximum(m, xs[c])

    es = [jnp.exp(xs[c] - m) for c in range(num_classes)]
    denom = es[0]
    for c in range(1, num_classes):
        denom = denom + es[c]
    lse = jnp.log(denom)                                      # (TR, 128)

    # Gather the target class per sample (one-hot select).  Padding rows have
    # t == -1, so they match no class and contribute exactly zero loss.
    zeros = jnp.zeros_like(m)
    log_pt = zeros
    alpha_t = zeros
    for c in range(num_classes):
        mask = t == c
        log_pt = jnp.where(mask, xs[c] - m - lse, log_pt)
        alpha_t = jnp.where(mask, alpha_ref[c], alpha_t)

    pt = jnp.exp(log_pt)                                      # p of target class
    one_minus_pt = 1.0 - pt
    if float(gamma) == int(gamma) and gamma >= 0:
        # Integer gamma: repeated VPU multiplies instead of EUP pow.
        w = jnp.ones_like(pt)
        for _ in range(int(gamma)):
            w = w * one_minus_pt
    else:
        # Clamp so an exact p_t == 1 cannot produce log(0) -> NaN inside pow.
        w = jnp.power(jnp.maximum(one_minus_pt, 1e-30), gamma)

    loss = -alpha_t * w * log_pt                              # (TR, 128)

    # Fold tile rows into the resident (8,128) accumulator with sublane-aligned
    # elementwise adds; the single cross-lane reduction happens once, outside.
    partial = loss.reshape(tile_rows // _SUBLANES, _SUBLANES, _LANES).sum(axis=0)
    out_ref[...] = out_ref[...] + partial[None, :, :]


def focal_loss(inputs, targets, alpha=None, gamma=2.0, reduction="mean"):
    """inputs: (N, C) logits (f32 or bf16); targets: (N,) int class ids."""
    n, c = inputs.shape
    if alpha is None:
        alpha = [0.16, 0.31, 0.53]
    alpha_arr = jnp.asarray(alpha, dtype=jnp.float32).reshape(-1)
    if alpha_arr.shape[0] != c:
        raise ValueError(
            f"alpha has {alpha_arr.shape[0]} entries but inputs have {c} classes")

    # --- choose tiling over the sample axis --------------------------------
    nr = pl.cdiv(n, _LANES)                                   # rows of 128 samples
    tile_rows = min(256, max(_SUBLANES, pl.next_power_of_2(nr)))
    n_tiles = pl.cdiv(nr, tile_rows)
    n_split = 2 if n_tiles >= 2 else 1                        # megacore split (v7x)
    n_tiles = pl.cdiv(n_tiles, n_split) * n_split
    tiles_per_split = n_tiles // n_split
    padded_n = n_tiles * tile_rows * _LANES

    # --- class-major, lane-dense layout (transpose/pad/reshape in wrapper) --
    x = jnp.transpose(inputs, (1, 0))                         # (C, N), native dtype
    x = jnp.pad(x, ((0, 0), (0, padded_n - n)))
    x = x.reshape(c, n_tiles * tile_rows, _LANES)             # (C, rows, 128)
    t = jnp.pad(targets.astype(jnp.int32), (0, padded_n - n), constant_values=-1)
    t = t.reshape(n_tiles * tile_rows, _LANES)                # (rows, 128)

    tps = tiles_per_split
    kernel = functools.partial(_focal_loss_kernel, gamma=float(gamma),
                               num_classes=c, tile_rows=tile_rows)
    partials = pl.pallas_call(
        kernel,
        out_shape=jax.ShapeDtypeStruct((n_split, _SUBLANES, _LANES), jnp.float32),
        grid_spec=pltpu.PrefetchScalarGridSpec(
            num_scalar_prefetch=0,
            grid=(n_split, tiles_per_split),
            in_specs=[
                # alpha: tiny per-class weights, kept in SMEM as scalars.
                pl.BlockSpec(memory_space=pltpu.MemorySpace.SMEM),
                # logits: (C, tile_rows, 128) class-major tile per step.
                pl.BlockSpec((c, tile_rows, _LANES),
                             lambda s, i: (0, s * tps + i, 0)),
                # targets: lane-dense int32 tile per step.
                pl.BlockSpec((tile_rows, _LANES),
                             lambda s, i: (s * tps + i, 0)),
            ],
            out_specs=pl.BlockSpec((1, _SUBLANES, _LANES),
                                   lambda s, i: (s, 0, 0)),
        ),
        compiler_params=pltpu.CompilerParams(
            dimension_semantics=("parallel", "arbitrary"),
            vmem_limit_bytes=32 * 1024 * 1024,
        ),
    )(alpha_arr, x, t)

    loss_sum = jnp.sum(partials)          # tiny (n_split, 8, 128) reduce in XLA

    if reduction == "mean":
        # torch loss.mean() averages over ALL N*C elements (zeros included).
        return loss_sum / (n * c)
    elif reduction == "sum":
        return loss_sum
    else:
        # TODO(synk): reduction='none' would need the per-element (N, C) loss
        # matrix as a kernel output; only reduced variants are implemented.
        raise NotImplementedError("reduction='none' not implemented in kernel")


def _focal_loss_ref(inputs, targets, alpha, gamma=2.0):
    log_probs = jax.nn.log_softmax(inputs.astype(jnp.float32), axis=-1)
    probs = jnp.exp(log_probs)
    one_hot = jax.nn.one_hot(targets, inputs.shape[-1], dtype=jnp.float32)
    focal_weight = (1.0 - probs) ** gamma
    loss = -alpha * focal_weight * log_probs * one_hot
    return loss.mean()


if __name__ == "__main__":
    key = jax.random.PRNGKey(0)
    k1, k2 = jax.random.split(key)
    N, C = 16, 3                      # 3 classes, matching the default alpha
    logits = jax.random.normal(k1, (N, C), dtype=jnp.float32)
    labels = jax.random.randint(k2, (N,), 0, C, dtype=jnp.int32)

    out = focal_loss(logits, labels)
    out = jax.block_until_ready(out)

    ref = _focal_loss_ref(logits, labels,
                          jnp.array([0.16, 0.31, 0.53], dtype=jnp.float32))
    assert jnp.allclose(out, ref, rtol=1e-5, atol=1e-6), (out, ref)
    print("KERNEL_OK")
</pallas_src>

<mosaic_0001>
module attributes {stable_mosaic.version = 11 : i64} {
  func.func @_focal_loss_kernel(%arg0: i32, %arg1: i32, %arg2: memref<3xf32, #tpu.memory_space<smem>>, %arg3: memref<3x8x128xf32, #tpu.memory_space<vmem>>, %arg4: memref<8x128xi32, #tpu.memory_space<vmem>>, %arg5: memref<1x8x128xf32, #tpu.memory_space<vmem>>) attributes {dimension_semantics = [#tpu.dimension_semantics<parallel>, #tpu.dimension_semantics<arbitrary>], iteration_bounds = array<i64: 1, 1>, scalar_prefetch = 0 : i64, scratch_operands = 0 : i64, tpu.core_type = #tpu.core_type<tc>, window_params = [{transform_indices = @transform_0, window_bounds = array<i64: 3>}, {transform_indices = @transform_1, window_bounds = array<i64: 3, 8, 128>}, {transform_indices = @transform_2, window_bounds = array<i64: 8, 128>}, {transform_indices = @transform_3, window_bounds = array<i64: 1, 8, 128>}]} {
    %c0_i32 = arith.constant 0 : i32
    %0 = arith.cmpi eq, %arg1, %c0_i32 : i32
    %1 = arith.extui %0 : i1 to i32
    %c0_i32_0 = arith.constant 0 : i32
    %2 = arith.cmpi ne, %1, %c0_i32_0 : i32
    scf.if %2 {
      %cst_23 = arith.constant 0.000000e+00 : f32
      %62 = vector.broadcast %cst_23 : f32 to vector<1x8x128xf32>
      %c0_24 = arith.constant 0 : index
      %c0_25 = arith.constant 0 : index
      %c0_26 = arith.constant 0 : index
      %63 = vector.load %arg5[%c0_24, %c0_25, %c0_26] : memref<1x8x128xf32, #tpu.memory_space<vmem>>, vector<1x8x128xf32>
      tpu.vector_store %arg5[%c0_24, %c0_25, %c0_26], %62 {strides = array<i32>} : memref<1x8x128xf32, #tpu.memory_space<vmem>>, vector<1x8x128xf32>,
    } else {
    }
    %c0 = arith.constant 0 : index
    %c0_1 = arith.constant 0 : index
    %3 = vector.load %arg4[%c0, %c0_1] : memref<8x128xi32, #tpu.memory_space<vmem>>, vector<8x128xi32>
    %c0_2 = arith.constant 0 : index
    %c0_3 = arith.constant 0 : index
    %c0_4 = arith.constant 0 : index
    %4 = vector.load %arg3[%c0_2, %c0_3, %c0_4] : memref<3x8x128xf32, #tpu.memory_space<vmem>>, vector<1x8x128xf32>
    %5 = vector.shape_cast %4 : vector<1x8x128xf32> to vector<8x128xf32>
    %c1 = arith.constant 1 : index
    %c0_5 = arith.constant 0 : index
    %c0_6 = arith.constant 0 : index
    %6 = vector.load %arg3[%c1, %c0_5, %c0_6] : memref<3x8x128xf32, #tpu.memory_space<vmem>>, vector<1x8x128xf32>
    %7 = vector.shape_cast %6 : vector<1x8x128xf32> to vector<8x128xf32>
    %c2 = arith.constant 2 : index
    %c0_7 = arith.constant 0 : index
    %c0_8 = arith.constant 0 : index
    %8 = vector.load %arg3[%c2, %c0_7, %c0_8] : memref<3x8x128xf32, #tpu.memory_space<vmem>>, vector<1x8x128xf32>
    %9 = vector.shape_cast %8 : vector<1x8x128xf32> to vector<8x128xf32>
    %10 = arith.maximumf %5, %7 : vector<8x128xf32>
    %11 = arith.maximumf %10, %9 : vector<8x128xf32>
    %12 = arith.subf %5, %11 : vector<8x128xf32>
    %13 = math.exp %12 : vector<8x128xf32>
    %14 = arith.subf %7, %11 : vector<8x128xf32>
    %15 = math.exp %14 : vector<8x128xf32>
    %16 = arith.subf %9, %11 : vector<8x128xf32>
    %17 = math.exp %16 : vector<8x128xf32>
    %18 = arith.addf %13, %15 : vector<8x128xf32>
    %19 = arith.addf %18, %17 : vector<8x128xf32>
    %20 = math.log %19 : vector<8x128xf32>
    %cst = arith.constant 0.000000e+00 : f32
    %21 = vector.broadcast %cst : f32 to vector<8x128xf32>
    %c0_i32_9 = arith.constant 0 : i32
    %22 = vector.broadcast %c0_i32_9 : i32 to vector<8x128xi32>
    %23 = arith.cmpi eq, %3, %22 : vector<8x128xi32>
    %24 = arith.subf %5, %11 : vector<8x128xf32>
    %25 = arith.subf %24, %20 : vector<8x128xf32>
    %26 = arith.select %23, %25, %21 : vector<8x128xi1>, vector<8x128xf32>
    %c0_10 = arith.constant 0 : index
    %27 = memref.load %arg2[%c0_10] : memref<3xf32, #tpu.memory_space<smem>>
    %28 = vector.broadcast %27 : f32 to vector<8x128xf32>
    %29 = arith.select %23, %28, %21 : vector<8x128xi1>, vector<8x128xf32>
    %c1_i32 = arith.constant 1 : i32
    %30 = vector.broadcast %c1_i32 : i32 to vector<8x128xi32>
    %31 = arith.cmpi eq, %3, %30 : vector<8x128xi32>
    %32 = arith.subf %7, %11 : vector<8x128xf32>
    %33 = arith.subf %32, %20 : vector<8x128xf32>
    %34 = arith.select %31, %33, %26 : vector<8x128xi1>, vector<8x128xf32>
    %c1_11 = arith.constant 1 : index
    %35 = memref.load %arg2[%c1_11] : memref<3xf32, #tpu.memory_space<smem>>
    %36 = vector.broadcast %35 : f32 to vector<8x128xf32>
    %37 = arith.select %31, %36, %29 : vector<8x128xi1>, vector<8x128xf32>
    %c2_i32 = arith.constant 2 : i32
    %38 = vector.broadcast %c2_i32 : i32 to vector<8x128xi32>
    %39 = arith.cmpi eq, %3, %38 : vector<8x128xi32>
    %40 = arith.subf %9, %11 : vector<8x128xf32>
    %41 = arith.subf %40, %20 : vector<8x128xf32>
    %42 = arith.select %39, %41, %34 : vector<8x128xi1>, vector<8x128xf32>
    %c2_12 = arith.constant 2 : index
    %43 = memref.load %arg2[%c2_12] : memref<3xf32, #tpu.memory_space<smem>>
    %44 = vector.broadcast %43 : f32 to vector<8x128xf32>
    %45 = arith.select %39, %44, %37 : vector<8x128xi1>, vector<8x128xf32>
    %46 = math.exp %42 : vector<8x128xf32>
    %cst_13 = arith.constant 1.000000e+00 : f32
    %47 = vector.broadcast %cst_13 : f32 to vector<8x128xf32>
    %48 = arith.subf %47, %46 : vector<8x128xf32>
    %cst_14 = arith.constant 1.000000e+00 : f32
    %49 = vector.broadcast %cst_14 : f32 to vector<8x128xf32>
    %50 = arith.mulf %49, %48 : vector<8x128xf32>
    %51 = arith.mulf %50, %48 : vector<8x128xf32>
    %cst_15 = arith.constant 0.000000e+00 : f32
    %52 = vector.broadcast %cst_15 : f32 to vector<8x128xf32>
    %53 = arith.subf %52, %45 : vector<8x128xf32>
    %54 = arith.mulf %53, %51 : vector<8x128xf32>
    %55 = arith.mulf %54, %42 : vector<8x128xf32>
    %56 = vector.shape_cast %55 : vector<8x128xf32> to vector<1x8x128xf32>
    %cst_16 = arith.constant dense<0.000000e+00> : vector<8x128xf32>
    %57 = vector.multi_reduction <add>, %56, %cst_16 [0] : vector<1x8x128xf32> to vector<8x128xf32>
    %c0_17 = arith.constant 0 : index
    %c0_18 = arith.constant 0 : index
    %c0_19 = arith.constant 0 : index
    %58 = vector.load %arg5[%c0_17, %c0_18, %c0_19] : memref<1x8x128xf32, #tpu.memory_space<vmem>>, vector<1x8x128xf32>
    %59 = vector.shape_cast %57 : vector<8x128xf32> to vector<1x8x128xf32>
    %60 = arith.addf %58, %59 : vector<1x8x128xf32>
    %c0_20 = arith.constant 0 : index
    %c0_21 = arith.constant 0 : index
    %c0_22 = arith.constant 0 : index
    %61 = vector.load %arg5[%c0_20, %c0_21, %c0_22] : memref<1x8x128xf32, #tpu.memory_space<vmem>>, vector<1x8x128xf32>
    tpu.vector_store %arg5[%c0_20, %c0_21, %c0_22], %60 {strides = array<i32>} : memref<1x8x128xf32, #tpu.memory_space<vmem>>, vector<1x8x128xf32>,
    return
  }
  func.func @transform_0(%arg0: i32, %arg1: i32) -> i32 {
    %c0_i32 = arith.constant 0 : i32
    %c0_i32_0 = arith.constant 0 : i32
    return %c0_i32 : i32
  }
  func.func @transform_1(%arg0: i32, %arg1: i32) -> (i32, i32, i32) {
    %c1_i32 = arith.constant 1 : i32
    %0 = arith.muli %arg0, %c1_i32 : i32
    %1 = arith.addi %0, %arg1 : i32
    %c0_i32 = arith.constant 0 : i32
    %c0_i32_0 = arith.constant 0 : i32
    %c0_i32_1 = arith.constant 0 : i32
    return %c0_i32, %1, %c0_i32_0 : i32, i32, i32
  }
  func.func @transform_2(%arg0: i32, %arg1: i32) -> (i32, i32) {
    %c1_i32 = arith.constant 1 : i32
    %0 = arith.muli %arg0, %c1_i32 : i32
    %1 = arith.addi %0, %arg1 : i32
    %c0_i32 = arith.constant 0 : i32
    %c0_i32_0 = arith.constant 0 : i32
    return %1, %c0_i32 : i32, i32
  }
  func.func @transform_3(%arg0: i32, %arg1: i32) -> (i32, i32, i32) {
    %c0_i32 = arith.constant 0 : i32
    %c0_i32_0 = arith.constant 0 : i32
    %c0_i32_1 = arith.constant 0 : i32
    return %arg0, %c0_i32, %c0_i32_0 : i32, i32, i32
  }
}

</mosaic_0001>

<llo_original>
// kernel: tpu_custom_call.1
$region0: #{tpu_custom_call.1}
  #allocation0 [shape = 'u32[]', space=smem, size = 0x4, offset = 0x4, fixed_abs, tag = 'smem constant byte address 0x4 - core index']
  #allocation1 [shape = 'u32[144,128]{1,0:T(1,128)}', space=vmem, size = 0x12000, scoped, tag = 'internal scratch']
  %s0 = inlined_call_operand.hbm [shape: f32[3], index: 0, kind: input, shape index: {}]
  %s1 = inlined_call_operand.hbm [shape: f32[3,8,128], index: 1, kind: input, shape index: {}]
  %s2 = inlined_call_operand.hbm [shape: s32[8,128], index: 2, kind: input, shape index: {}]
  %s3 = inlined_call_operand.hbm [shape: f32[1,8,128], index: 3, kind: output, shape index: {}]
  %s4 = sld [smem:[#allocation0]]
  $region38: #{tpu_custom_call.1} parent=0
    _
  %s6 = ssub.s32 1, %s4
  %s7 = scalar_select 0, %s6, %s4
  $region1: #{tpu_custom_call.1} parent=0
    #allocation2 [shape = 'u8[512]{0}', space=smem, size = 0x200, scoped, tag = 'input window, operand 0, single buffered']
    #allocation3 [shape = 's32[1]{0}', space=sflag, size = 0x4, scoped, tag = 'scoped memory for tpu_custom_call.1']
    #allocation4 [shape = 's32[1]{0}', space=sflag, size = 0x4, scoped, tag = 'scoped memory for tpu_custom_call.1']
    #allocation5 [shape = 's32[1]{0}', space=sflag, size = 0x4, scoped, tag = 'scoped memory for tpu_custom_call.1']
    #allocation6 [shape = 'u8[12288]{0}', space=vmem, size = 0x3000, scoped, tag = 'input window, operand 1, single buffered']
    #allocation7 [shape = 'u8[4096]{0}', space=vmem, size = 0x1000, scoped, tag = 'input window, operand 2, single buffered']
    #allocation8 [shape = 's32[1]{0}', space=sflag, size = 0x4, scoped, tag = 'scoped memory for tpu_custom_call.1']
    #allocation9 [shape = 'u8[4096]{0}', space=vmem, size = 0x1000, scoped, tag = 'output window, operand 0, single buffered']
    %8 = vsyncpa [#allocation5], 0
    %9 = vsyncpa [#allocation3], 0
    %10 = vsyncpa [#allocation8], 0
    %11 = vsyncpa [#allocation4], 0
    // Predicated region
    $region2: #{tpu_custom_call.1} parent=1 // pred_check
      _
    $region3: #{tpu_custom_call.1} parent=1 // pred_check_branch
      %13 = sbr.rel (0) target = $region5
    $region4: #{tpu_custom_call.1} parent=1 // pred_region
      %s15 = ssub.s32 16, 16
      %16 = vsyncadd [#allocation5], %s15
      %19 = dma.hbm_to_smem %s0, 16, [#allocation2], [#allocation5]
    $region5: #{tpu_custom_call.1} parent=1 // pred_fallthru
      _
    // Predicated region
    $region6: #{tpu_custom_call.1} parent=1 // pred_check
      _
    $region7: #{tpu_custom_call.1} parent=1 // pred_check_branch
      %21 = sbr.rel (0) target = $region9
    $region8: #{tpu_custom_call.1} parent=1 // pred_region
      %s22 = sadd.s32 0, 0
      %s24 = ssub.s32 384, 384
      %25 = vsyncadd [#allocation3], %s24
      %s26 = smul.addr %s22, 128
      %s27 = scalar_lea.hbm %s1, %s26
      %s28 = sshll.u32 [#allocation6], 4
      %s29 = int_to_ptr.vmem [resolvable:$true] %s28
      %34 = dma.hbm_to_vmem [thread:$0]  %s27, 384, %s29, [#allocation3], 128, 128, 8
    $region9: #{tpu_custom_call.1} parent=1 // pred_fallthru
      _
    // Predicated region
    $region10: #{tpu_custom_call.1} parent=1 // pred_check
      _
    $region11: #{tpu_custom_call.1} parent=1 // pred_check_branch
      %36 = sbr.rel (0) target = $region13
    $region12: #{tpu_custom_call.1} parent=1 // pred_region
      %s37 = sadd.s32 0, 0
      %s39 = ssub.s32 128, 128
      %40 = vsyncadd [#allocation8], %s39
      %s41 = smul.addr %s37, 128
      %s42 = scalar_lea.hbm %s2, %s41
      %s44 = sshll.u32 [#allocation7], 4
      %s45 = int_to_ptr.vmem [resolvable:$true] %s44
      %47 = dma.hbm_to_vmem [thread:$0]  %s42, 128, %s45, [#allocation8]
    $region13: #{tpu_custom_call.1} parent=1 // pred_fallthru
      _
    // Predicated region
    $region14: #{tpu_custom_call.1} parent=1 // pred_check
      _
    $region15: #{tpu_custom_call.1} parent=1 // pred_check_branch
      %49 = sbr.rel (0) target = $region17
    $region16: #{tpu_custom_call.1} parent=1 // pred_region
      %50 = dma.done [#allocation5], 16
    $region17: #{tpu_custom_call.1} parent=1 // pred_fallthru
      _
    // Predicated region
    $region18: #{tpu_custom_call.1} parent=1 // pred_check
      _
    $region19: #{tpu_custom_call.1} parent=1 // pred_check_branch
      %52 = sbr.rel (0) target = $region21
    $region20: #{tpu_custom_call.1} parent=1 // pred_region
      %53 = dma.done [#allocation3], 384
    $region21: #{tpu_custom_call.1} parent=1 // pred_fallthru
      _
    // Predicated region
    $region22: #{tpu_custom_call.1} parent=1 // pred_check
      _
    $region23: #{tpu_custom_call.1} parent=1 // pred_check_branch
      %55 = sbr.rel (0) target = $region25
    $region24: #{tpu_custom_call.1} parent=1 // pred_region
      %56 = dma.done [#allocation8], 128
    $region25: #{tpu_custom_call.1} parent=1 // pred_fallthru
      _
    %57 = sfence
    %s58 = sadd.s32 0, 0
    %s59 = sadd.s32 0, 0
    %p60 = scmp.eq.s32.totalorder 0, 0
    // Predicated region
    $region26: #{tpu_custom_call.1} parent=1 // pred_check
      %p61 = pneg %p60
    $region27: #{tpu_custom_call.1} parent=1 // pred_check_branch
      %63 = sbr.rel (%p61) target = $region29
    $region28: #{tpu_custom_call.1} parent=1 // pred_region
      %64 = vst [vmem:[#allocation9] sm:$0xff] 0.0
    $region29: #{tpu_custom_call.1} parent=1 // pred_fallthru
      _
    %v65 = vld [vmem:[#allocation7] sm:$0xff]
    %v66 = vld [vmem:[#allocation6] sm:$0xff]
    %s67 = scalar_lea.vmem [#allocation6], 8
    %v68 = vld [vmem:[%s67] sm:$0xff]
    %s69 = scalar_lea.vmem [#allocation6], 16
    %v70 = vld [vmem:[%s69] sm:$0xff]
    %v71 = vmax.f32 %v66, %v68
    %v72 = vmax.f32 %v71, %v70
    %v73 = vsub.f32 %v66, %v72
    %v74 = vmul.f32 %v73, 1.442695
    %v75 = vpow.pop %v74
    %v76 = vsub.f32 %v68, %v72
    %v77 = vmul.f32 %v76, 1.442695
    %v78 = vpow.pop %v77
    %v79 = vsub.f32 %v70, %v72
    %v80 = vmul.f32 %v79, 1.442695
    %v81 = vpow.pop %v80
    %v82 = vadd.f32 %v75, %v78
    %v83 = vadd.f32 %v82, %v81
    %v84 = vlog2.pop %v83
    %v85 = vmul.f32 %v84, 0.6931472
    %vm86 = vcmp.eq.s32.totalorder %v65, 0
    %v87 = vsub.f32 %v73, %v85
    %v88 = vsel %vm86, %v87, 0.0
    %s89 = sld [smem:[#allocation2]]
    %v90 = vstv %s89
    %v91 = vsel %vm86, %v90, 0.0
    %vm92 = vcmp.eq.s32.totalorder %v65, 1
    %v93 = vsub.f32 %v76, %v85
    %v94 = vsel %vm92, %v93, %v88
    %s95 = sld [smem:[#allocation2 + $0x1]]
    %v96 = vstv %s95
    %v97 = vsel %vm92, %v96, %v91
    %vm98 = vcmp.eq.s32.totalorder %v65, 2
    %v99 = vsub.f32 %v79, %v85
    %v100 = vsel %vm98, %v99, %v94
    %s101 = sld [smem:[#allocation2 + $0x2]]
    %v102 = vstv %s101
    %v103 = vsel %vm98, %v102, %v97
    %v104 = vmul.f32 %v100, 1.442695
    %v105 = vpow.pop %v104
    %v106 = vsub.f32 1.0, %v105
    %v107 = vmul.f32 %v106, %v106
    %v108 = vsub.f32 0.0, %v103
    %v109 = vmul.f32 %v108, %v107
    %v110 = vmul.f32 %v109, %v100
    %v111 = vadd.f32 %v110, 0.0
    %v112 = vld [vmem:[#allocation9] sm:$0xff]
    %v113 = vadd.f32 %v112, %v111
    %114 = vst [vmem:[#allocation9] sm:$0xff] %v113
    // Predicated region
    $region30: #{tpu_custom_call.1} parent=1 // pred_check
      _
    $region31: #{tpu_custom_call.1} parent=1 // pred_check_branch
      %116 = sbr.rel (0) target = $region33
    $region32: #{tpu_custom_call.1} parent=1 // pred_region
      %s118 = ssub.s32 128, 128
      %119 = vsyncadd [#allocation4], %s118
      %s121 = sshll.u32 [#allocation9], 4
      %s122 = int_to_ptr.vmem [resolvable:$true] %s121
      %124 = dma.vmem_to_hbm [thread:$0]  %s122, 128, %s3, [#allocation4]
    $region33: #{tpu_custom_call.1} parent=1 // pred_fallthru
      _
    // Predicated region
    $region34: #{tpu_custom_call.1} parent=1 // pred_check
      _
    $region35: #{tpu_custom_call.1} parent=1 // pred_check_branch
      %126 = sbr.rel (0) target = $region37
    $region36: #{tpu_custom_call.1} parent=1 // pred_region
      %127 = dma.done [#allocation4], 128
    $region37: #{tpu_custom_call.1} parent=1 // pred_fallthru
      _
    %128 = vsyncpa [#allocation3], 1
    %129 = vsyncpa [#allocation8], 1
    %130 = vsyncpa [#allocation4], 1
    %131 = vsyncpa [#allocation5], 1

</llo_original>
